<compile_context>
chip_gen: v6e
topology: v6e:2x2x1
jax: 0.10.0
libtpu: 0.0.40
codegen_flags: <defaults>
</compile_context>

<pallas_src>
import functools

import jax
import jax.numpy as jnp
from jax import lax
from jax.experimental import pallas as pl
from jax.experimental.pallas import tpu as pltpu


# --------------------------------------------------------------------------
# Hardware capability query (safe fallbacks: v7x-conservative VMEM, 1 core).
# --------------------------------------------------------------------------
def _tpu_caps():
    """Returns (tensorcores_per_chip, physical_vmem_bytes) with safe fallbacks."""
    vmem = 64 << 20          # conservative: v7x has 64 MiB per TensorCore
    cores = 1                # v5e / v6e have a single TensorCore
    try:
        info = pltpu.get_tpu_info()
        for attr in ("vmem_capacity_bytes", "vmem_size_bytes", "vmem_bytes"):
            v = getattr(info, attr, None)
            if v:
                vmem = int(v)
                break
        for attr in ("num_cores", "tensorcores_per_chip", "core_count"):
            v = getattr(info, attr, None)
            if isinstance(v, int) and v > 0:
                cores = v
                break
    except Exception:
        pass
    try:
        v = getattr(jax.devices()[0], "num_cores", None)
        if isinstance(v, int) and v > cores:
            cores = v
    except Exception:
        pass
    return cores, vmem


# --------------------------------------------------------------------------
# Path A: whole-plane blocks (TB, H, W) -- the common case.
# --------------------------------------------------------------------------
def _divergence_plane_kernel(x_ref, o_ref, *, inv_dx, roll_sub, roll_lane):
    tb, h, w = x_ref.shape

    def plane(b, carry):
        x = x_ref[b].astype(jnp.float32)  # (H, W), f32 accumulation

        if roll_sub:
            # XLU sublane rotates (vector-extended slot; non-negative shifts).
            x_im1 = pltpu.roll(x, 1, 0)        # x[i-1, j]
            x_ip1 = pltpu.roll(x, h - 1, 0)    # x[i+1, j]
        else:
            x_ip1 = jnp.concatenate([x[1:, :], x[:1, :]], axis=0)
            x_im1 = jnp.concatenate([x[-1:, :], x[:-1, :]], axis=0)

        if roll_lane:
            x_jm1 = pltpu.roll(x, 1, 1)        # x[i, j-1]
            x_jp1 = pltpu.roll(x, w - 1, 1)    # x[i, j+1]
        else:
            x_jp1 = jnp.concatenate([x[:, 1:], x[:, :1]], axis=1)
            x_jm1 = jnp.concatenate([x[:, -1:], x[:, :-1]], axis=1)

        # Conv channel 0 + conv channel 1, i.e. GradientFilter(...).sum(axis=1)
        div = ((x_ip1 - x_im1) + (x_jp1 - x_jm1)) * inv_dx
        o_ref[b] = div.astype(o_ref.dtype)
        return carry

    if tb <= 2:
        for b in range(tb):          # at most 2 planes of temporaries co-live
            plane(b, 0)
    else:
        # fori_loop bounds live ranges; unroll=2 keeps LLO scheduler visibility
        # without making ~tb planes of f32 temporaries co-live.
        lax.fori_loop(0, tb, plane, 0, unroll=2)


# --------------------------------------------------------------------------
# Path B: H-tiled blocks with a circular halo (for planes too big for VMEM).
# The i+-1 neighbours at slab edges come from two extra 8-row blocks of the
# same input whose index_maps compute the wrapped row -> only 2 lane rolls.
# --------------------------------------------------------------------------
def _divergence_htile_kernel(xm_ref, xt_ref, xb_ref, o_ref, *, inv_dx, roll_lane):
    xm = xm_ref[0].astype(jnp.float32)            # (TH, W) slab
    xt = xt_ref[0][7:8, :].astype(jnp.float32)    # wrapped row above the slab
    xb = xb_ref[0][0:1, :].astype(jnp.float32)    # wrapped row below the slab
    th, w = xm.shape

    x_ip1 = jnp.concatenate([xm[1:, :], xb], axis=0)   # x[i+1, j]
    x_im1 = jnp.concatenate([xt, xm[:-1, :]], axis=0)  # x[i-1, j]

    if roll_lane:
        x_jm1 = pltpu.roll(xm, 1, 1)       # x[i, j-1]
        x_jp1 = pltpu.roll(xm, w - 1, 1)   # x[i, j+1]
    else:
        x_jp1 = jnp.concatenate([xm[:, 1:], xm[:, :1]], axis=1)
        x_jm1 = jnp.concatenate([xm[:, -1:], xm[:, :-1]], axis=1)

    div = ((x_ip1 - x_im1) + (x_jp1 - x_jm1)) * inv_dx
    o_ref[0] = div.astype(o_ref.dtype)


# --------------------------------------------------------------------------
# Wrapper
# --------------------------------------------------------------------------
def divergence_filter(x, dx=1.0, *, block_bytes_target=8 << 20,
                      vmem_budget_bytes=None):
    """out[n,0,i,j] = (x[i+1,j]-x[i-1,j]+x[i,j+1]-x[i,j-1]) / dx (periodic)."""
    N, C, H, W = x.shape
    if C != 1:
        raise ValueError("DivergenceFilter expects a single input channel")
    x3 = x.reshape(N, H, W)

    itemsize = x.dtype.itemsize
    plane_bytes = H * W * itemsize
    plane_f32 = H * W * 4
    inv_dx = float(1.0 / dx)

    cores, vmem_phys = _tpu_caps()
    vmem_cap = int(0.8 * vmem_phys)                      # hard per-chip cap
    budget = vmem_budget_bytes if vmem_budget_bytes is not None else vmem_cap

    cost_est = pl.CostEstimate(
        flops=4 * N * H * W, transcendentals=0,
        bytes_accessed=2 * N * H * W * itemsize)

    # Explicit VMEM byte budget: double-buffered in+out blocks + ~6 f32
    # plane-sized temporaries per in-flight plane (x2 for the unrolled loop).
    def whole_plane_cost(tb):
        return 2 * 2 * tb * plane_bytes + min(tb, 2) * 6 * plane_f32

    h_divs = [d for d in range(8, H, 8) if H % d == 0]
    use_h_tiling = (whole_plane_cost(1) > budget) and bool(h_divs)

    roll_lane = (W % 128 == 0)
    # Keep the sublane roll behind the known-good full (8,128) gate; lane
    # rolls are decoupled so one unaligned axis no longer disables both.
    roll_sub = (H % 8 == 0) and (W % 128 == 0)

    if not use_h_tiling:
        # ------------------ Path A: whole-plane blocks --------------------
        # TODO(synk): planes whose whole-plane VMEM cost exceeds the budget
        # and whose H has no multiple-of-8 divisor fall through here with
        # tb=1 (best effort); an Element-based ragged halo would cover them.
        min_grid_steps = 2 * max(1, cores)   # 2 on v5e/v6e, 4 on v7x (2 TCs)
        tb = max(1, min(N, block_bytes_target // max(plane_bytes, 1)))
        tb = min(tb, max(1, pl.cdiv(N, min_grid_steps)))
        while tb > 1 and whole_plane_cost(tb) > budget:
            tb -= 1
        grid = (pl.cdiv(N, tb),)             # ragged last block is masked

        needed = whole_plane_cost(tb)
        vmem_limit = int(min(vmem_cap, max(32 << 20, 2 * needed)))

        kernel = functools.partial(
            _divergence_plane_kernel, inv_dx=inv_dx,
            roll_sub=roll_sub, roll_lane=roll_lane)

        out = pl.pallas_call(
            kernel,
            out_shape=jax.ShapeDtypeStruct((N, H, W), x.dtype),
            grid=grid,
            in_specs=[pl.BlockSpec((tb, H, W), lambda n: (n, 0, 0))],
            out_specs=pl.BlockSpec((tb, H, W), lambda n: (n, 0, 0)),
            compiler_params=pltpu.CompilerParams(
                dimension_semantics=("parallel",),
                vmem_limit_bytes=vmem_limit),
            cost_estimate=cost_est,
        )(x3)
    else:
        # ------------- Path B: H-tiled blocks + circular halo -------------
        def h_cost(th):
            blk_io = 2 * th * W * itemsize          # main in + out block
            halo = 2 * 8 * W * itemsize             # two 8-row halo blocks
            temps = 6 * th * W * 4                  # f32 shifted copies etc.
            return 2 * (blk_io + halo) + temps      # x2: double buffering

        th = None
        for d in sorted(h_divs, reverse=True):
            if h_cost(d) <= budget:
                th = d
                break
        if th is None:
            th = min(h_divs)
        grid = (N, H // th)

        needed = h_cost(th)
        vmem_limit = int(min(vmem_cap, max(32 << 20, 2 * needed)))

        # Block index maps. Halo blocks are 8 rows (keeps the (8,128) block
        # constraint); the needed wrapped row sits at sublane 7 (top) / 0
        # (bottom) because th is a multiple of 8.
        def main_map(n, h):
            return (n, h, 0)

        def top_map(n, h):
            return (n, ((h * th + H - 1) % H) // 8, 0)

        def bot_map(n, h):
            return (n, (((h + 1) * th) % H) // 8, 0)

        kernel = functools.partial(
            _divergence_htile_kernel, inv_dx=inv_dx, roll_lane=roll_lane)

        out = pl.pallas_call(
            kernel,
            out_shape=jax.ShapeDtypeStruct((N, H, W), x.dtype),
            grid=grid,
            in_specs=[pl.BlockSpec((1, th, W), main_map),
                      pl.BlockSpec((1, 8, W), top_map),
                      pl.BlockSpec((1, 8, W), bot_map)],
            out_specs=pl.BlockSpec((1, th, W), main_map),
            compiler_params=pltpu.CompilerParams(
                dimension_semantics=("parallel", "parallel"),
                vmem_limit_bytes=vmem_limit),
            cost_estimate=cost_est,
        )(x3, x3, x3)

    # matches `.view(*x.shape)` in the PyTorch module
    return out.reshape(x.shape)


def _reference(x, dx=1.0):
    # Pure-JAX reference of the same forward semantics.
    xs = x[:, 0]  # (N, H, W)
    div = (jnp.roll(xs, -1, axis=1) - jnp.roll(xs, 1, axis=1)
           + jnp.roll(xs, -1, axis=2) - jnp.roll(xs, 1, axis=2)) / dx
    return div.reshape(x.shape)


if __name__ == "__main__":
    key = jax.random.PRNGKey(0)
    k1, k2, k3, k4 = jax.random.split(key, 4)

    # Case 1: (8,128)-aligned plane -> sublane+lane pltpu.roll fast path.
    x1 = jax.random.normal(k1, (2, 1, 16, 128), dtype=jnp.float32)
    y1 = jax.block_until_ready(divergence_filter(x1, dx=0.5))
    assert y1.shape == x1.shape and y1.dtype == x1.dtype
    assert jnp.allclose(y1, _reference(x1, dx=0.5), atol=1e-5, rtol=1e-5), \
        "mismatch vs reference (aligned / roll path)"

    # Case 2: small unaligned plane (16x16) -> concat fallback on both axes.
    x2 = jax.random.normal(k2, (2, 1, 16, 16), dtype=jnp.float32)
    y2 = jax.block_until_ready(divergence_filter(x2, dx=1.0))
    assert y2.shape == x2.shape and y2.dtype == x2.dtype
    assert jnp.allclose(y2, _reference(x2, dx=1.0), atol=1e-6), \
        "mismatch vs reference (unaligned / fallback path)"

    # Case 3: ragged batch (N=11 -> tb=6, cdiv grid with a masked partial
    # last block) + in-kernel fori_loop(unroll=2) over planes.
    x3_ = jax.random.normal(k3, (11, 1, 16, 128), dtype=jnp.float32)
    y3 = jax.block_until_ready(divergence_filter(x3_, dx=1.5))
    assert y3.shape == x3_.shape and y3.dtype == x3_.dtype
    assert jnp.allclose(y3, _reference(x3_, dx=1.5), atol=1e-5, rtol=1e-5), \
        "mismatch vs reference (ragged batch path)"

    # Case 4: force the H-tiled circular-halo path with a tiny tiling budget.
    x4 = jax.random.normal(k4, (1, 1, 256, 256), dtype=jnp.float32)
    y4 = jax.block_until_ready(
        divergence_filter(x4, dx=2.0, vmem_budget_bytes=1 << 20))
    assert y4.shape == x4.shape and y4.dtype == x4.dtype
    assert jnp.allclose(y4, _reference(x4, dx=2.0), atol=1e-5, rtol=1e-5), \
        "mismatch vs reference (H-tiled halo path)"

    print("KERNEL_OK")
</pallas_src>

<mosaic_0001>
module attributes {stable_mosaic.version = 11 : i64} {
  func.func @_divergence_plane_kernel(%arg0: i32, %arg1: memref<1x16x128xf32, #tpu.memory_space<vmem>>, %arg2: memref<1x16x128xf32, #tpu.memory_space<vmem>>) attributes {dimension_semantics = [#tpu.dimension_semantics<parallel>], iteration_bounds = array<i64: 2>, scalar_prefetch = 0 : i64, scratch_operands = 0 : i64, tpu.core_type = #tpu.core_type<tc>, window_params = [{transform_indices = @transform_0, window_bounds = array<i64: 1, 16, 128>}, {transform_indices = @transform_1, window_bounds = array<i64: 1, 16, 128>}]} {
    %c0 = arith.constant 0 : index
    %c0_0 = arith.constant 0 : index
    %c0_1 = arith.constant 0 : index
    %0 = vector.load %arg1[%c0, %c0_0, %c0_1] : memref<1x16x128xf32, #tpu.memory_space<vmem>>, vector<1x16x128xf32>
    %1 = vector.shape_cast %0 : vector<1x16x128xf32> to vector<16x128xf32>
    %c1_i32 = arith.constant 1 : i32
    %2 = tpu.dynamic_rotate %1 by %c1_i32 dim 0 : vector<16x128xf32>, i32 -> vector<16x128xf32>
    %c15_i32 = arith.constant 15 : i32
    %3 = tpu.dynamic_rotate %1 by %c15_i32 dim 0 : vector<16x128xf32>, i32 -> vector<16x128xf32>
    %c1_i32_2 = arith.constant 1 : i32
    %4 = tpu.dynamic_rotate %1 by %c1_i32_2 dim 1 : vector<16x128xf32>, i32 -> vector<16x128xf32>
    %c127_i32 = arith.constant 127 : i32
    %5 = tpu.dynamic_rotate %1 by %c127_i32 dim 1 : vector<16x128xf32>, i32 -> vector<16x128xf32>
    %6 = arith.subf %3, %2 : vector<16x128xf32>
    %7 = arith.subf %5, %4 : vector<16x128xf32>
    %8 = arith.addf %6, %7 : vector<16x128xf32>
    %cst = arith.constant 2.000000e+00 : f32
    %9 = vector.broadcast %cst : f32 to vector<16x128xf32>
    %10 = arith.mulf %8, %9 : vector<16x128xf32>
    %c0_3 = arith.constant 0 : index
    %c0_4 = arith.constant 0 : index
    %c0_5 = arith.constant 0 : index
    %11 = vector.load %arg2[%c0_3, %c0_4, %c0_5] : memref<1x16x128xf32, #tpu.memory_space<vmem>>, vector<1x16x128xf32>
    %12 = vector.shape_cast %11 : vector<1x16x128xf32> to vector<16x128xf32>
    %13 = vector.shape_cast %10 : vector<16x128xf32> to vector<1x16x128xf32>
    tpu.vector_store %arg2[%c0_3, %c0_4, %c0_5], %13 {strides = array<i32>} : memref<1x16x128xf32, #tpu.memory_space<vmem>>, vector<1x16x128xf32>,
    return
  }
  func.func @transform_0(%arg0: i32) -> (i32, i32, i32) {
    %c0_i32 = arith.constant 0 : i32
    %c0_i32_0 = arith.constant 0 : i32
    %c0_i32_1 = arith.constant 0 : i32
    return %arg0, %c0_i32, %c0_i32_0 : i32, i32, i32
  }
  func.func @transform_1(%arg0: i32) -> (i32, i32, i32) {
    %c0_i32 = arith.constant 0 : i32
    %c0_i32_0 = arith.constant 0 : i32
    %c0_i32_1 = arith.constant 0 : i32
    return %arg0, %c0_i32, %c0_i32_0 : i32, i32, i32
  }
}

</mosaic_0001>

<llo_original>
// kernel: tpu_custom_call.1
$region0: #{tpu_custom_call.1}
  #allocation0 [shape = 'u32[]', space=smem, size = 0x4, offset = 0x4, fixed_abs, tag = 'smem constant byte address 0x4 - core index']
  #allocation1 [shape = 'u32[144,128]{1,0:T(1,128)}', space=vmem, size = 0x12000, scoped, tag = 'internal scratch']
  %s0 = inlined_call_operand.hbm [shape: f32[2,16,128], index: 0, kind: input, shape index: {}]
  %s1 = inlined_call_operand.hbm [shape: f32[2,16,128], index: 1, kind: output, shape index: {}]
  %s2 = sld [smem:[#allocation0]]
  $region41: #{tpu_custom_call.1} parent=0
    _
  %s4 = ssub.s32 1, %s2
  %s5 = scalar_select 0, %s4, %s2
  $region1: #{tpu_custom_call.1} parent=0
    #allocation2 [shape = 'u8[16384]{0}', space=vmem, size = 0x4000, scoped, tag = 'input window, operand 0']
    #allocation3 [shape = 's32[2]{0}', space=sflag, size = 0x8, scoped, tag = 'scoped memory for tpu_custom_call.1']
    #allocation4 [shape = 's32[2]{0}', space=sflag, size = 0x8, scoped, tag = 'scoped memory for tpu_custom_call.1']
    #allocation5 [shape = 'u8[16384]{0}', space=vmem, size = 0x4000, scoped, tag = 'output window, operand 0']
    %6 = vsyncpa [#allocation3], 0
    %s7 = scalar_lea.sflag [#allocation3], 1
    %8 = vsyncpa %s7, 0
    %9 = vsyncpa [#allocation4], 0
    %s10 = scalar_lea.sflag [#allocation4], 1
    %11 = vsyncpa %s10, 0
    loop: start=0, step=1, limit=4
    $region2: #{tpu_custom_call.1} parent=1 // loop_pre_header
      _
    $region3: #{tpu_custom_call.1} parent=1 // loop_header
      %s13 = sphi 0, %s17
      %p14 = scmp.ge.s32.totalorder %s13, 4
      %s23 = sphi 0, %s25
      %s26 = sphi 0, %s23
      %s27 = sphi 0, %s26
      %s43 = sphi 0, %s27
      %s49 = sphi 0, %s51
      %s52 = sphi 0, %s49
      %s53 = sphi 0, %s52
      %s69 = sphi 0, %s53
    $region4: #{tpu_custom_call.1} parent=1 // loop_header_branch
      %16 = sbr.rel (%p14) target = $region8
    $region5: #{tpu_custom_call.1} parent=1 // loop_body
      %s18 = ssub.s32 %s13, 1
      %s19 = ssub.s32 %s13, 2
      %s20 = sadd.s32 %s13, 1
      %s21 = ssub.s32 %s13, %s20
      %p22 = scmp.eq.s32.totalorder %s21, 0
      %s24 = sadd.s32 %s23, 1
      %s25 = scalar_select %p22, %s23, %s24
      %p28 = pneg %p22
      %p29 = scmp.eq.s32.totalorder %s13, 1
      %p30 = por %p28, %p29
      %p31 = scmp.ne.s32.totalorder %s23, %s26
      %p32 = scmp.eq.s32.totalorder %s13, 0
      %p33 = por %p31, %p32
      %p34 = scmp.ne.s32.totalorder %s23, %s26
      %p35 = scmp.eq.s32.totalorder %s18, 1
      %p36 = por %p34, %p35
      %p37 = scmp.ne.s32.totalorder %s26, %s27
      %p38 = scmp.eq.s32.totalorder %s18, 0
      %p39 = por %p37, %p38
      %p40 = scmp.ne.s32.totalorder %s26, %s27
      %p41 = scmp.eq.s32.totalorder %s19, 1
      %p42 = por %p40, %p41
      %p44 = scmp.ne.s32.totalorder %s27, %s43
      %p45 = scmp.eq.s32.totalorder %s19, 0
      %p46 = por %p44, %p45
      %s47 = ssub.s32 %s13, %s20
      %p48 = scmp.eq.s32.totalorder %s47, 0
      %s50 = sadd.s32 %s49, 1
      %s51 = scalar_select %p48, %s49, %s50
      %p54 = pneg %p48
      %p55 = scmp.eq.s32.totalorder %s13, 1
      %p56 = por %p54, %p55
      %p57 = scmp.ne.s32.totalorder %s49, %s52
      %p58 = scmp.eq.s32.totalorder %s13, 0
      %p59 = por %p57, %p58
      %p60 = scmp.ne.s32.totalorder %s49, %s52
      %p61 = scmp.eq.s32.totalorder %s18, 1
      %p62 = por %p60, %p61
      %p63 = scmp.ne.s32.totalorder %s52, %s53
      %p64 = scmp.eq.s32.totalorder %s18, 0
      %p65 = por %p63, %p64
      %p66 = scmp.ne.s32.totalorder %s52, %s53
      %p67 = scmp.eq.s32.totalorder %s19, 1
      %p68 = por %p66, %p67
      %p70 = scmp.ne.s32.totalorder %s53, %s69
      %p71 = scmp.eq.s32.totalorder %s19, 0
      %p72 = por %p70, %p71
      %p73 = scmp.le.s32.totalorder 1, %s13
      %p74 = scmp.lt.s32.totalorder %s13, 3
      %p75 = pnand %p73, %p74
      %p76 = pneg %p75
      // Predicated region
      $region9: #{tpu_custom_call.1} parent=5 // pred_check
        _
      $region10: #{tpu_custom_call.1} parent=5 // pred_check_branch
        %78 = sbr.rel (%p75) target = $region12
      $region11: #{tpu_custom_call.1} parent=5 // pred_region
        %s79 = ssub.s32 %s13, 1
      $region12: #{tpu_custom_call.1} parent=5 // pred_fallthru
        _
      %p80 = scmp.lt.s32.totalorder %s13, 2
      // Predicated region
      $region13: #{tpu_custom_call.1} parent=5 // pred_check
        %p81 = pneg %p80
      $region14: #{tpu_custom_call.1} parent=5 // pred_check_branch
        %83 = sbr.rel (%p81) target = $region16
      $region15: #{tpu_custom_call.1} parent=5 // pred_region
        // Predicated region
        $region17: #{tpu_custom_call.1} parent=15 // pred_check
          %p84 = pneg %p33
        $region18: #{tpu_custom_call.1} parent=15 // pred_check_branch
          %86 = sbr.rel (%p84) target = $region20
        $region19: #{tpu_custom_call.1} parent=15 // pred_region
          %s87 = sand.u32 %s23, 1
          %s88 = scalar_lea.sflag [#allocation3], %s87
          %s89 = sand.u32 %s23, 1
          %s90 = smul.addr %s89, 16
          %s91 = scalar_lea.vmem [#allocation2], %s90
          %s93 = ssub.s32 256, 256
          %94 = vsyncadd %s88, %s93
          %s95 = smul.addr %s13, 2
          %s96 = smul.addr %s95, 128
          %s97 = scalar_lea.hbm %s0, %s96
          %s98 = sshll.u32 %s91, 4
          %s99 = int_to_ptr.vmem [resolvable:$true] %s98
          %104 = dma.hbm_to_vmem [thread:$0]  %s97, 256, %s99, %s88, 128, 128, 8
        $region20: #{tpu_custom_call.1} parent=15 // pred_fallthru
          _
      $region16: #{tpu_custom_call.1} parent=5 // pred_fallthru
        _
      %p105 = scmp.le.s32.totalorder 1, %s13
      %p106 = scmp.lt.s32.totalorder %s13, 3
      %p107 = pnand %p105, %p106
      %p108 = pneg %p107
      // Predicated region
      $region21: #{tpu_custom_call.1} parent=5 // pred_check
        _
      $region22: #{tpu_custom_call.1} parent=5 // pred_check_branch
        %110 = sbr.rel (%p107) target = $region24
      $region23: #{tpu_custom_call.1} parent=5 // pred_region
        %s111 = ssub.s32 %s13, 1
        %s112 = sand.u32 %s26, 1
        %s113 = scalar_lea.sflag [#allocation3], %s112
        %s114 = sand.u32 %s26, 1
        %s115 = smul.addr %s114, 16
        %s116 = scalar_lea.vmem [#allocation2], %s115
        // Predicated region
        $region25: #{tpu_custom_call.1} parent=23 // pred_check
          %p117 = pneg %p39
        $region26: #{tpu_custom_call.1} parent=23 // pred_check_branch
          %119 = sbr.rel (%p117) target = $region28
        $region27: #{tpu_custom_call.1} parent=23 // pred_region
          %120 = dma.done %s113, 256
        $region28: #{tpu_custom_call.1} parent=23 // pred_fallthru
          _
        %s121 = sand.u32 %s26, 1
        %s122 = scalar_lea.sflag [#allocation3], %s121
        %s123 = sand.u32 %s26, 1
        %s124 = smul.addr %s123, 16
        %s125 = scalar_lea.vmem [#allocation2], %s124
        %p126 = pneg %p39
        %p127 = pneg %p36
        %p128 = pneg %p65
        %p129 = pneg %p62
        %s130 = sand.u32 %s52, 1
        %s131 = scalar_lea.sflag [#allocation4], %s130
        %s132 = sand.u32 %s52, 1
        %s133 = smul.addr %s132, 16
        %s134 = scalar_lea.vmem [#allocation5], %s133
        %v135 = vld [vmem:[%s116] sm:$0xff]
        %v136 = vld [vmem:[%s116 + $0x8] sm:$0xff]
        %v137 = vrot.slane %v135, 7
        %v138 = vrot.slane %v136, 7
        %v139 = vlaneseq
        %v140 = vshrl.u32 %v139, 7
        %vm141 = vcmp.lt.s32.totalorder %v140, 1
        %v142 = vsel %vm141, %v137, %v138
        %v143 = vsel %vm141, %v138, %v137
        %v144 = vrot.slane %v135, 1
        %v145 = vrot.slane %v136, 1
        %vm146 = vcmp.lt.s32.totalorder %v140, 7
        %v147 = vsel %vm146, %v144, %v145
        %v148 = vsel %vm146, %v145, %v144
        %149 = vrot.lane.b32.xlu0 %v135, 1
        %v150 = vpop.permute.xlu0 %149
        %151 = vrot.lane.b32.xlu0 %v136, 1
        %v152 = vpop.permute.xlu0 %151
        %153 = vrot.lane.b32.xlu0 %v135, 127
        %v154 = vpop.permute.xlu0 %153
        %155 = vrot.lane.b32.xlu0 %v136, 127
        %v156 = vpop.permute.xlu0 %155
        %v157 = vsub.f32 %v147, %v143
        %v158 = vsub.f32 %v148, %v142
        %v159 = vsub.f32 %v154, %v150
        %v160 = vsub.f32 %v156, %v152
        %v161 = vadd.f32 %v157, %v159
        %v162 = vadd.f32 %v158, %v160
        %v163 = vmul.f32 %v161, 2.0
        %v164 = vmul.f32 %v162, 2.0
        %165 = vst [vmem:[%s134] sm:$0xff] %v163
        %166 = vst [vmem:[%s134 + $0x8] sm:$0xff] %v164
        %s167 = sand.u32 %s52, 1
        %s168 = scalar_lea.sflag [#allocation4], %s167
        %s169 = sand.u32 %s52, 1
        %s170 = smul.addr %s169, 16
        %s171 = scalar_lea.vmem [#allocation5], %s170
        // Predicated region
        $region29: #{tpu_custom_call.1} parent=23 // pred_check
          %p172 = pneg %p62
        $region30: #{tpu_custom_call.1} parent=23 // pred_check_branch
          %174 = sbr.rel (%p172) target = $region32
        $region31: #{tpu_custom_call.1} parent=23 // pred_region
          %s176 = ssub.s32 256, 256
          %177 = vsyncadd %s168, %s176
          %s178 = smul.addr %s18, 2
          %s179 = smul.addr %s178, 128
          %s180 = scalar_lea.hbm %s1, %s179
          %s181 = sshll.u32 %s171, 4
          %s182 = int_to_ptr.vmem [resolvable:$true] %s181
          %187 = dma.vmem_to_hbm [thread:$0]  %s182, 256, %s180, %s168, 128, 128, 8
        $region32: #{tpu_custom_call.1} parent=23 // pred_fallthru
          _
      $region24: #{tpu_custom_call.1} parent=5 // pred_fallthru
        _
      %p188 = scmp.le.s32.totalorder 2, %s13
      // Predicated region
      $region33: #{tpu_custom_call.1} parent=5 // pred_check
        %p189 = pneg %p188
      $region34: #{tpu_custom_call.1} parent=5 // pred_check_branch
        %191 = sbr.rel (%p189) target = $region36
      $region35: #{tpu_custom_call.1} parent=5 // pred_region
        %s192 = ssub.s32 %s13, 2
        // Predicated region
        $region37: #{tpu_custom_call.1} parent=35 // pred_check
          %p193 = pneg %p68
        $region38: #{tpu_custom_call.1} parent=35 // pred_check_branch
          %195 = sbr.rel (%p193) target = $region40
        $region39: #{tpu_custom_call.1} parent=35 // pred_region
          %s196 = sand.u32 %s53, 1
          %s197 = scalar_lea.sflag [#allocation4], %s196
          %s198 = sand.u32 %s53, 1
          %s199 = smul.addr %s198, 16
          %s200 = scalar_lea.vmem [#allocation5], %s199
          %201 = dma.done %s197, 256
        $region40: #{tpu_custom_call.1} parent=35 // pred_fallthru
          _
      $region36: #{tpu_custom_call.1} parent=5 // pred_fallthru
        _
    $region6: #{tpu_custom_call.1} parent=1 // loop_footer
      %s17 = sadd.s32 1, %s13
    $region7: #{tpu_custom_call.1} parent=1 // loop_footer_branch
      %12 = sbr.rel target = $region3
    $region8: #{tpu_custom_call.1} parent=1 // loop_exit
      _
    %202 = vsyncpa [#allocation3], 1
    %s203 = scalar_lea.sflag [#allocation3], 1
    %204 = vsyncpa %s203, 1
    %205 = vsyncpa [#allocation4], 1
    %s206 = scalar_lea.sflag [#allocation4], 1
    %207 = vsyncpa %s206, 1

</llo_original>
